<compile_context>
chip_gen: v7x
topology: tpu7x:2x2x1
jax: 0.10.0
libtpu: 0.0.40
codegen_flags: <defaults>
</compile_context>

<pallas_src>
import jax
import jax.numpy as jnp
from jax.experimental import pallas as pl
from jax.experimental.pallas import tpu as pltpu


# ----------------------------------------------------------------------------
# Pallas kernel: in-kernel table gather + lerp, then 2x (matmul + bias + SiLU)
# ----------------------------------------------------------------------------
def _diff_embed_kernel(low_idx_ref, high_idx_ref,          # SMEM (scalar prefetch)
                       frac_ref,                           # SMEM input (f32)
                       table_ref, w1_ref, b1_ref, w2_ref, b2_ref,  # VMEM inputs
                       out_ref,                            # VMEM output (tm, H)
                       x_ref):                             # VMEM scratch (tm, 2E) f32
    tm = out_ref.shape[0]
    base = pl.program_id(0) * tm

    # Gather + lerp directly from the VMEM-resident table.  Indices/frac are
    # SMEM scalars, rows are (1, 2E) tiles indexed on the leading (non-tiled)
    # axis of the (T, 1, 2E) table.  On the integer path high == low and
    # frac == 0 (the duplicate row read is a cheap VMEM read, not an HBM DMA).
    for i in range(tm):                     # tm is small & static -> unrolled
        li = low_idx_ref[base + i]
        hi = high_idx_ref[base + i]
        f = frac_ref[base + i]
        lo_row = table_ref[li]              # (1, 2E) f32
        hi_row = table_ref[hi]              # (1, 2E) f32
        x_ref[pl.ds(i, 1), :] = lo_row + f * (hi_row - lo_row)

    mx_dtype = w1_ref.dtype                 # bf16 (or f32) MXU operand dtype
    x = x_ref[...].astype(mx_dtype)

    # projection1 + SiLU  (MXU matmul, f32 accumulate; exp + approx recip -> EUP)
    h = jnp.dot(x, w1_ref[...], preferred_element_type=jnp.float32) + b1_ref[...]
    h = h * pl.reciprocal(1.0 + jnp.exp(-h), approx=True)

    # projection2 + SiLU
    o = jnp.dot(h.astype(mx_dtype), w2_ref[...],
                preferred_element_type=jnp.float32) + b2_ref[...]
    o = o * pl.reciprocal(1.0 + jnp.exp(-o), approx=True)

    out_ref[...] = o.astype(out_ref.dtype)


def _run_pallas(low_idx, high_idx, frac, table3, w1, b1, w2, b2, *, tm):
    bp = low_idx.shape[0]                   # padded batch (multiple of tm)
    t_steps, _, e2 = table3.shape
    hdim = w1.shape[1]
    grid = (bp // tm,)

    flops = 2 * bp * (e2 * hdim + hdim * hdim) + 4 * bp * e2
    transcendentals = 4 * bp * hdim          # 2x exp + 2x approx reciprocal
    bytes_accessed = (table3.size * table3.dtype.itemsize
                      + w1.size * w1.dtype.itemsize
                      + w2.size * w2.dtype.itemsize
                      + (b1.size + b2.size) * 4
                      + (low_idx.size + high_idx.size + frac.size) * 4
                      + bp * hdim * 4)

    grid_spec = pltpu.PrefetchScalarGridSpec(
        num_scalar_prefetch=2,              # low_idx, high_idx -> SMEM
        grid=grid,
        in_specs=[
            # frac: small (Bp,) f32 vector, kept whole in SMEM
            pl.BlockSpec(memory_space=pltpu.MemorySpace.SMEM),
            # table / weights / biases: full blocks, constant index_map -> VMEM-resident
            pl.BlockSpec((t_steps, 1, e2), lambda i, *_: (0, 0, 0)),
            pl.BlockSpec((e2, hdim), lambda i, *_: (0, 0)),
            pl.BlockSpec((1, hdim), lambda i, *_: (0, 0)),
            pl.BlockSpec((hdim, hdim), lambda i, *_: (0, 0)),
            pl.BlockSpec((1, hdim), lambda i, *_: (0, 0)),
        ],
        out_specs=pl.BlockSpec((tm, hdim), lambda i, *_: (i, 0)),
        scratch_shapes=[pltpu.VMEM((tm, e2), jnp.float32)],
    )

    return pl.pallas_call(
        _diff_embed_kernel,
        out_shape=jax.ShapeDtypeStruct((bp, hdim), jnp.float32),
        grid_spec=grid_spec,
        compiler_params=pltpu.CompilerParams(
            dimension_semantics=("parallel",)),   # shard batch tiles across TCs (v7x)
        cost_estimate=pl.CostEstimate(
            flops=flops,
            transcendentals=transcendentals,
            bytes_accessed=bytes_accessed),
    )(low_idx, high_idx, frac, table3, w1, b1, w2, b2)


# ----------------------------------------------------------------------------
# Module-equivalent wrapper
# ----------------------------------------------------------------------------
def build_embedding(diff_embed_size: int, max_steps: int) -> jnp.ndarray:
    steps = jnp.arange(max_steps, dtype=jnp.float32)[:, None]       # (T, 1)
    dims = jnp.arange(diff_embed_size, dtype=jnp.float32)[None, :]  # (1, E)
    # NOTE: the PyTorch module hard-codes the 63.0 denominator independently of
    # diff_embed_size; we match the module exactly.
    table = steps * 10.0 ** (dims * 4.0 / 63.0)                     # (T, E)
    return jnp.concatenate([jnp.sin(table), jnp.cos(table)], axis=1)  # (T, 2E)


def init_params(key, diff_embed_size: int, diff_hidden_size: int,
                matmul_dtype=jnp.bfloat16):
    """torch.nn.Linear-style init (uniform +-1/sqrt(in)); weights stored in the
    MXU operand dtype (bf16 halves weight DMA + MXU passes), biases in f32."""
    in1 = 2 * diff_embed_size
    k1, k2, k3, k4 = jax.random.split(key, 4)
    lim1 = 1.0 / jnp.sqrt(in1)
    lim2 = 1.0 / jnp.sqrt(diff_hidden_size)
    w1 = jax.random.uniform(k1, (in1, diff_hidden_size), jnp.float32, -lim1, lim1)
    b1 = jax.random.uniform(k2, (1, diff_hidden_size), jnp.float32, -lim1, lim1)
    w2 = jax.random.uniform(k3, (diff_hidden_size, diff_hidden_size), jnp.float32, -lim2, lim2)
    b2 = jax.random.uniform(k4, (1, diff_hidden_size), jnp.float32, -lim2, lim2)
    return w1.astype(matmul_dtype), b1, w2.astype(matmul_dtype), b2


def _round_up(n: int, m: int) -> int:
    return (n + m - 1) // m * m


def diffusion_embedding_forward(diffusion_step, embedding, params):
    """Semantics of DiffusionEmbedding.forward.

    diffusion_step: (B,) int  -> direct table lookup
                    (B,) float -> lerp between floor/ceil rows
    returns: (B, diff_hidden_size) float32
    """
    w1, b1, w2, b2 = params
    b = diffusion_step.shape[0]

    if jnp.issubdtype(diffusion_step.dtype, jnp.integer):
        low_idx = diffusion_step.astype(jnp.int32)
        high_idx = low_idx                      # same row; no duplicate HBM DMA
        frac = jnp.zeros((b,), jnp.float32)
    else:
        t = diffusion_step.astype(jnp.float32)
        low_idx = jnp.floor(t).astype(jnp.int32)
        high_idx = jnp.ceil(t).astype(jnp.int32)
        frac = t - low_idx.astype(jnp.float32)

    # Batch tile: multiple of 8 sublanes, capped so the unrolled in-kernel
    # gather loop stays small.
    # TODO(synk): for large batches, switch the gather to a vectorized one-hot
    # matmul so tm can grow to >=256 rows (full v6e/v7x MXU utilization).
    tm = min(128, _round_up(max(b, 8), 8))
    bp = _round_up(b, tm)
    pad = bp - b
    if pad:
        low_idx = jnp.pad(low_idx, (0, pad))
        high_idx = jnp.pad(high_idx, (0, pad))
        frac = jnp.pad(frac, (0, pad))

    # (T, 2E) -> (T, 1, 2E): dynamic gather indexes the leading (non-tiled) axis.
    table3 = embedding.reshape(embedding.shape[0], 1, embedding.shape[1])

    out = _run_pallas(low_idx, high_idx, frac, table3, w1, b1, w2, b2, tm=tm)
    return out[:b]


# ----------------------------------------------------------------------------
# Reference (plain JAX, f32 math) for sanity check
# ----------------------------------------------------------------------------
def _reference(diffusion_step, embedding, params):
    w1, b1, w2, b2 = [p.astype(jnp.float32) for p in params]
    if jnp.issubdtype(diffusion_step.dtype, jnp.integer):
        x = embedding[diffusion_step]
    else:
        t = diffusion_step.astype(jnp.float32)
        lo = jnp.floor(t).astype(jnp.int32)
        hi = jnp.ceil(t).astype(jnp.int32)
        x = embedding[lo] + (t - lo)[:, None] * (embedding[hi] - embedding[lo])
    h = x @ w1 + b1
    h = h * jax.nn.sigmoid(h)
    o = h @ w2 + b2
    return o * jax.nn.sigmoid(o)


if __name__ == "__main__":
    diff_embed_size = 64      # -> 2E = 128 input features (lane-aligned)
    diff_hidden_size = 128
    max_steps = 50
    batch = 8                 # sublane-aligned small batch

    key = jax.random.PRNGKey(0)
    kp, kt_f, kt_i = jax.random.split(key, 3)

    embedding = build_embedding(diff_embed_size, max_steps)      # (50, 128) f32
    params = init_params(kp, diff_embed_size, diff_hidden_size)  # bf16 W, f32 b

    fwd = jax.jit(diffusion_embedding_forward)

    # float diffusion steps -> in-kernel lerp path
    t_float = jax.random.uniform(kt_f, (batch,), jnp.float32,
                                 0.0, float(max_steps - 1))
    out_f = jax.block_until_ready(fwd(t_float, embedding, params))
    ref_f = _reference(t_float, embedding, params)

    # integer diffusion steps -> direct lookup path (frac = 0)
    t_int = jax.random.randint(kt_i, (batch,), 0, max_steps, dtype=jnp.int32)
    out_i = jax.block_until_ready(fwd(t_int, embedding, params))
    ref_i = _reference(t_int, embedding, params)

    assert out_f.shape == (batch, diff_hidden_size)
    assert out_i.shape == (batch, diff_hidden_size)
    # bf16 MXU operands + EUP approx reciprocal -> relaxed tolerance vs f32 ref.
    assert jnp.allclose(out_f, ref_f, atol=5e-2, rtol=5e-2), \
        float(jnp.max(jnp.abs(out_f - ref_f)))
    assert jnp.allclose(out_i, ref_i, atol=5e-2, rtol=5e-2), \
        float(jnp.max(jnp.abs(out_i - ref_i)))

    print("KERNEL_OK")
</pallas_src>

<mosaic_0001>
module attributes {stable_mosaic.version = 11 : i64} {
  func.func @_diff_embed_kernel(%arg0: i32, %arg1: memref<8xi32, #tpu.memory_space<smem>>, %arg2: memref<8xi32, #tpu.memory_space<smem>>, %arg3: memref<8xf32, #tpu.memory_space<smem>>, %arg4: memref<50x1x128xf32, #tpu.memory_space<vmem>>, %arg5: memref<128x128xbf16, #tpu.memory_space<vmem>>, %arg6: memref<1x128xf32, #tpu.memory_space<vmem>>, %arg7: memref<128x128xbf16, #tpu.memory_space<vmem>>, %arg8: memref<1x128xf32, #tpu.memory_space<vmem>>, %arg9: memref<8x128xf32, #tpu.memory_space<vmem>>, %arg10: memref<8x128xf32, #tpu.memory_space<vmem>>) attributes {dimension_semantics = [#tpu.dimension_semantics<parallel>], iteration_bounds = array<i64: 1>, scalar_prefetch = 2 : i64, scratch_operands = 1 : i64, tpu.core_type = #tpu.core_type<tc>, window_params = [{transform_indices = @transform_0, window_bounds = array<i64: 8>}, {pipeline_mode = #tpu.pipeline_mode<synchronous>, transform_indices = @transform_1, window_bounds = array<i64: 50, 1, 128>}, {pipeline_mode = #tpu.pipeline_mode<synchronous>, transform_indices = @transform_2, window_bounds = array<i64: 128, 128>}, {pipeline_mode = #tpu.pipeline_mode<synchronous>, transform_indices = @transform_3, window_bounds = array<i64: 1, 128>}, {pipeline_mode = #tpu.pipeline_mode<synchronous>, transform_indices = @transform_4, window_bounds = array<i64: 128, 128>}, {pipeline_mode = #tpu.pipeline_mode<synchronous>, transform_indices = @transform_5, window_bounds = array<i64: 1, 128>}, {transform_indices = @transform_6, window_bounds = array<i64: 8, 128>}]} {
    %c8_i32 = arith.constant 8 : i32
    %0 = arith.muli %arg0, %c8_i32 : i32
    %c0_i32 = arith.constant 0 : i32
    %1 = arith.addi %0, %c0_i32 : i32
    %2 = arith.index_cast %1 : i32 to index
    %3 = memref.load %arg1[%2] : memref<8xi32, #tpu.memory_space<smem>>
    %c0_i32_0 = arith.constant 0 : i32
    %4 = arith.addi %0, %c0_i32_0 : i32
    %5 = arith.index_cast %4 : i32 to index
    %6 = memref.load %arg2[%5] : memref<8xi32, #tpu.memory_space<smem>>
    %c0_i32_1 = arith.constant 0 : i32
    %7 = arith.addi %0, %c0_i32_1 : i32
    %8 = arith.index_cast %7 : i32 to index
    %9 = memref.load %arg3[%8] : memref<8xf32, #tpu.memory_space<smem>>
    %10 = arith.index_cast %3 : i32 to index
    %c0 = arith.constant 0 : index
    %c0_2 = arith.constant 0 : index
    %11 = vector.load %arg4[%10, %c0, %c0_2] : memref<50x1x128xf32, #tpu.memory_space<vmem>>, vector<1x1x128xf32>
    %12 = vector.shape_cast %11 : vector<1x1x128xf32> to vector<1x128xf32>
    %13 = arith.index_cast %6 : i32 to index
    %c0_3 = arith.constant 0 : index
    %c0_4 = arith.constant 0 : index
    %14 = vector.load %arg4[%13, %c0_3, %c0_4] : memref<50x1x128xf32, #tpu.memory_space<vmem>>, vector<1x1x128xf32>
    %15 = vector.shape_cast %14 : vector<1x1x128xf32> to vector<1x128xf32>
    %16 = arith.subf %15, %12 : vector<1x128xf32>
    %17 = vector.broadcast %9 : f32 to vector<1x128xf32>
    %18 = arith.mulf %17, %16 : vector<1x128xf32>
    %19 = arith.addf %12, %18 : vector<1x128xf32>
    %c0_5 = arith.constant 0 : index
    %c0_6 = arith.constant 0 : index
    %20 = vector.load %arg10[%c0_5, %c0_6] : memref<8x128xf32, #tpu.memory_space<vmem>>, vector<1x128xf32>
    tpu.vector_store %arg10[%c0_5, %c0_6], %19 {strides = array<i32>} : memref<8x128xf32, #tpu.memory_space<vmem>>, vector<1x128xf32>,
    %c1_i32 = arith.constant 1 : i32
    %21 = arith.addi %0, %c1_i32 : i32
    %22 = arith.index_cast %21 : i32 to index
    %23 = memref.load %arg1[%22] : memref<8xi32, #tpu.memory_space<smem>>
    %c1_i32_7 = arith.constant 1 : i32
    %24 = arith.addi %0, %c1_i32_7 : i32
    %25 = arith.index_cast %24 : i32 to index
    %26 = memref.load %arg2[%25] : memref<8xi32, #tpu.memory_space<smem>>
    %c1_i32_8 = arith.constant 1 : i32
    %27 = arith.addi %0, %c1_i32_8 : i32
    %28 = arith.index_cast %27 : i32 to index
    %29 = memref.load %arg3[%28] : memref<8xf32, #tpu.memory_space<smem>>
    %30 = arith.index_cast %23 : i32 to index
    %c0_9 = arith.constant 0 : index
    %c0_10 = arith.constant 0 : index
    %31 = vector.load %arg4[%30, %c0_9, %c0_10] : memref<50x1x128xf32, #tpu.memory_space<vmem>>, vector<1x1x128xf32>
    %32 = vector.shape_cast %31 : vector<1x1x128xf32> to vector<1x128xf32>
    %33 = arith.index_cast %26 : i32 to index
    %c0_11 = arith.constant 0 : index
    %c0_12 = arith.constant 0 : index
    %34 = vector.load %arg4[%33, %c0_11, %c0_12] : memref<50x1x128xf32, #tpu.memory_space<vmem>>, vector<1x1x128xf32>
    %35 = vector.shape_cast %34 : vector<1x1x128xf32> to vector<1x128xf32>
    %36 = arith.subf %35, %32 : vector<1x128xf32>
    %37 = vector.broadcast %29 : f32 to vector<1x128xf32>
    %38 = arith.mulf %37, %36 : vector<1x128xf32>
    %39 = arith.addf %32, %38 : vector<1x128xf32>
    %c1 = arith.constant 1 : index
    %c0_13 = arith.constant 0 : index
    %40 = vector.load %arg10[%c1, %c0_13] : memref<8x128xf32, #tpu.memory_space<vmem>>, vector<1x128xf32>
    tpu.vector_store %arg10[%c1, %c0_13], %39 {strides = array<i32>} : memref<8x128xf32, #tpu.memory_space<vmem>>, vector<1x128xf32>,
    %c2_i32 = arith.constant 2 : i32
    %41 = arith.addi %0, %c2_i32 : i32
    %42 = arith.index_cast %41 : i32 to index
    %43 = memref.load %arg1[%42] : memref<8xi32, #tpu.memory_space<smem>>
    %c2_i32_14 = arith.constant 2 : i32
    %44 = arith.addi %0, %c2_i32_14 : i32
    %45 = arith.index_cast %44 : i32 to index
    %46 = memref.load %arg2[%45] : memref<8xi32, #tpu.memory_space<smem>>
    %c2_i32_15 = arith.constant 2 : i32
    %47 = arith.addi %0, %c2_i32_15 : i32
    %48 = arith.index_cast %47 : i32 to index
    %49 = memref.load %arg3[%48] : memref<8xf32, #tpu.memory_space<smem>>
    %50 = arith.index_cast %43 : i32 to index
    %c0_16 = arith.constant 0 : index
    %c0_17 = arith.constant 0 : index
    %51 = vector.load %arg4[%50, %c0_16, %c0_17] : memref<50x1x128xf32, #tpu.memory_space<vmem>>, vector<1x1x128xf32>
    %52 = vector.shape_cast %51 : vector<1x1x128xf32> to vector<1x128xf32>
    %53 = arith.index_cast %46 : i32 to index
    %c0_18 = arith.constant 0 : index
    %c0_19 = arith.constant 0 : index
    %54 = vector.load %arg4[%53, %c0_18, %c0_19] : memref<50x1x128xf32, #tpu.memory_space<vmem>>, vector<1x1x128xf32>
    %55 = vector.shape_cast %54 : vector<1x1x128xf32> to vector<1x128xf32>
    %56 = arith.subf %55, %52 : vector<1x128xf32>
    %57 = vector.broadcast %49 : f32 to vector<1x128xf32>
    %58 = arith.mulf %57, %56 : vector<1x128xf32>
    %59 = arith.addf %52, %58 : vector<1x128xf32>
    %c2 = arith.constant 2 : index
    %c0_20 = arith.constant 0 : index
    %60 = vector.load %arg10[%c2, %c0_20] : memref<8x128xf32, #tpu.memory_space<vmem>>, vector<1x128xf32>
    tpu.vector_store %arg10[%c2, %c0_20], %59 {strides = array<i32>} : memref<8x128xf32, #tpu.memory_space<vmem>>, vector<1x128xf32>,
    %c3_i32 = arith.constant 3 : i32
    %61 = arith.addi %0, %c3_i32 : i32
    %62 = arith.index_cast %61 : i32 to index
    %63 = memref.load %arg1[%62] : memref<8xi32, #tpu.memory_space<smem>>
    %c3_i32_21 = arith.constant 3 : i32
    %64 = arith.addi %0, %c3_i32_21 : i32
    %65 = arith.index_cast %64 : i32 to index
    %66 = memref.load %arg2[%65] : memref<8xi32, #tpu.memory_space<smem>>
    %c3_i32_22 = arith.constant 3 : i32
    %67 = arith.addi %0, %c3_i32_22 : i32
    %68 = arith.index_cast %67 : i32 to index
    %69 = memref.load %arg3[%68] : memref<8xf32, #tpu.memory_space<smem>>
    %70 = arith.index_cast %63 : i32 to index
    %c0_23 = arith.constant 0 : index
    %c0_24 = arith.constant 0 : index
    %71 = vector.load %arg4[%70, %c0_23, %c0_24] : memref<50x1x128xf32, #tpu.memory_space<vmem>>, vector<1x1x128xf32>
    %72 = vector.shape_cast %71 : vector<1x1x128xf32> to vector<1x128xf32>
    %73 = arith.index_cast %66 : i32 to index
    %c0_25 = arith.constant 0 : index
    %c0_26 = arith.constant 0 : index
    %74 = vector.load %arg4[%73, %c0_25, %c0_26] : memref<50x1x128xf32, #tpu.memory_space<vmem>>, vector<1x1x128xf32>
    %75 = vector.shape_cast %74 : vector<1x1x128xf32> to vector<1x128xf32>
    %76 = arith.subf %75, %72 : vector<1x128xf32>
    %77 = vector.broadcast %69 : f32 to vector<1x128xf32>
    %78 = arith.mulf %77, %76 : vector<1x128xf32>
    %79 = arith.addf %72, %78 : vector<1x128xf32>
    %c3 = arith.constant 3 : index
    %c0_27 = arith.constant 0 : index
    %80 = vector.load %arg10[%c3, %c0_27] : memref<8x128xf32, #tpu.memory_space<vmem>>, vector<1x128xf32>
    tpu.vector_store %arg10[%c3, %c0_27], %79 {strides = array<i32>} : memref<8x128xf32, #tpu.memory_space<vmem>>, vector<1x128xf32>,
    %c4_i32 = arith.constant 4 : i32
    %81 = arith.addi %0, %c4_i32 : i32
    %82 = arith.index_cast %81 : i32 to index
    %83 = memref.load %arg1[%82] : memref<8xi32, #tpu.memory_space<smem>>
    %c4_i32_28 = arith.constant 4 : i32
    %84 = arith.addi %0, %c4_i32_28 : i32
    %85 = arith.index_cast %84 : i32 to index
    %86 = memref.load %arg2[%85] : memref<8xi32, #tpu.memory_space<smem>>
    %c4_i32_29 = arith.constant 4 : i32
    %87 = arith.addi %0, %c4_i32_29 : i32
    %88 = arith.index_cast %87 : i32 to index
    %89 = memref.load %arg3[%88] : memref<8xf32, #tpu.memory_space<smem>>
    %90 = arith.index_cast %83 : i32 to index
    %c0_30 = arith.constant 0 : index
    %c0_31 = arith.constant 0 : index
    %91 = vector.load %arg4[%90, %c0_30, %c0_31] : memref<50x1x128xf32, #tpu.memory_space<vmem>>, vector<1x1x128xf32>
    %92 = vector.shape_cast %91 : vector<1x1x128xf32> to vector<1x128xf32>
    %93 = arith.index_cast %86 : i32 to index
    %c0_32 = arith.constant 0 : index
    %c0_33 = arith.constant 0 : index
    %94 = vector.load %arg4[%93, %c0_32, %c0_33] : memref<50x1x128xf32, #tpu.memory_space<vmem>>, vector<1x1x128xf32>
    %95 = vector.shape_cast %94 : vector<1x1x128xf32> to vector<1x128xf32>
    %96 = arith.subf %95, %92 : vector<1x128xf32>
    %97 = vector.broadcast %89 : f32 to vector<1x128xf32>
    %98 = arith.mulf %97, %96 : vector<1x128xf32>
    %99 = arith.addf %92, %98 : vector<1x128xf32>
    %c4 = arith.constant 4 : index
    %c0_34 = arith.constant 0 : index
    %100 = vector.load %arg10[%c4, %c0_34] : memref<8x128xf32, #tpu.memory_space<vmem>>, vector<1x128xf32>
    tpu.vector_store %arg10[%c4, %c0_34], %99 {strides = array<i32>} : memref<8x128xf32, #tpu.memory_space<vmem>>, vector<1x128xf32>,
    %c5_i32 = arith.constant 5 : i32
    %101 = arith.addi %0, %c5_i32 : i32
    %102 = arith.index_cast %101 : i32 to index
    %103 = memref.load %arg1[%102] : memref<8xi32, #tpu.memory_space<smem>>
    %c5_i32_35 = arith.constant 5 : i32
    %104 = arith.addi %0, %c5_i32_35 : i32
    %105 = arith.index_cast %104 : i32 to index
    %106 = memref.load %arg2[%105] : memref<8xi32, #tpu.memory_space<smem>>
    %c5_i32_36 = arith.constant 5 : i32
    %107 = arith.addi %0, %c5_i32_36 : i32
    %108 = arith.index_cast %107 : i32 to index
    %109 = memref.load %arg3[%108] : memref<8xf32, #tpu.memory_space<smem>>
    %110 = arith.index_cast %103 : i32 to index
    %c0_37 = arith.constant 0 : index
    %c0_38 = arith.constant 0 : index
    %111 = vector.load %arg4[%110, %c0_37, %c0_38] : memref<50x1x128xf32, #tpu.memory_space<vmem>>, vector<1x1x128xf32>
    %112 = vector.shape_cast %111 : vector<1x1x128xf32> to vector<1x128xf32>
    %113 = arith.index_cast %106 : i32 to index
    %c0_39 = arith.constant 0 : index
    %c0_40 = arith.constant 0 : index
    %114 = vector.load %arg4[%113, %c0_39, %c0_40] : memref<50x1x128xf32, #tpu.memory_space<vmem>>, vector<1x1x128xf32>
    %115 = vector.shape_cast %114 : vector<1x1x128xf32> to vector<1x128xf32>
    %116 = arith.subf %115, %112 : vector<1x128xf32>
    %117 = vector.broadcast %109 : f32 to vector<1x128xf32>
    %118 = arith.mulf %117, %116 : vector<1x128xf32>
    %119 = arith.addf %112, %118 : vector<1x128xf32>
    %c5 = arith.constant 5 : index
    %c0_41 = arith.constant 0 : index
    %120 = vector.load %arg10[%c5, %c0_41] : memref<8x128xf32, #tpu.memory_space<vmem>>, vector<1x128xf32>
    tpu.vector_store %arg10[%c5, %c0_41], %119 {strides = array<i32>} : memref<8x128xf32, #tpu.memory_space<vmem>>, vector<1x128xf32>,
    %c6_i32 = arith.constant 6 : i32
    %121 = arith.addi %0, %c6_i32 : i32
    %122 = arith.index_cast %121 : i32 to index
    %123 = memref.load %arg1[%122] : memref<8xi32, #tpu.memory_space<smem>>
    %c6_i32_42 = arith.constant 6 : i32
    %124 = arith.addi %0, %c6_i32_42 : i32
    %125 = arith.index_cast %124 : i32 to index
    %126 = memref.load %arg2[%125] : memref<8xi32, #tpu.memory_space<smem>>
    %c6_i32_43 = arith.constant 6 : i32
    %127 = arith.addi %0, %c6_i32_43 : i32
    %128 = arith.index_cast %127 : i32 to index
    %129 = memref.load %arg3[%128] : memref<8xf32, #tpu.memory_space<smem>>
    %130 = arith.index_cast %123 : i32 to index
    %c0_44 = arith.constant 0 : index
    %c0_45 = arith.constant 0 : index
    %131 = vector.load %arg4[%130, %c0_44, %c0_45] : memref<50x1x128xf32, #tpu.memory_space<vmem>>, vector<1x1x128xf32>
    %132 = vector.shape_cast %131 : vector<1x1x128xf32> to vector<1x128xf32>
    %133 = arith.index_cast %126 : i32 to index
    %c0_46 = arith.constant 0 : index
    %c0_47 = arith.constant 0 : index
    %134 = vector.load %arg4[%133, %c0_46, %c0_47] : memref<50x1x128xf32, #tpu.memory_space<vmem>>, vector<1x1x128xf32>
    %135 = vector.shape_cast %134 : vector<1x1x128xf32> to vector<1x128xf32>
    %136 = arith.subf %135, %132 : vector<1x128xf32>
    %137 = vector.broadcast %129 : f32 to vector<1x128xf32>
    %138 = arith.mulf %137, %136 : vector<1x128xf32>
    %139 = arith.addf %132, %138 : vector<1x128xf32>
    %c6 = arith.constant 6 : index
    %c0_48 = arith.constant 0 : index
    %140 = vector.load %arg10[%c6, %c0_48] : memref<8x128xf32, #tpu.memory_space<vmem>>, vector<1x128xf32>
    tpu.vector_store %arg10[%c6, %c0_48], %139 {strides = array<i32>} : memref<8x128xf32, #tpu.memory_space<vmem>>, vector<1x128xf32>,
    %c7_i32 = arith.constant 7 : i32
    %141 = arith.addi %0, %c7_i32 : i32
    %142 = arith.index_cast %141 : i32 to index
    %143 = memref.load %arg1[%142] : memref<8xi32, #tpu.memory_space<smem>>
    %c7_i32_49 = arith.constant 7 : i32
    %144 = arith.addi %0, %c7_i32_49 : i32
    %145 = arith.index_cast %144 : i32 to index
    %146 = memref.load %arg2[%145] : memref<8xi32, #tpu.memory_space<smem>>
    %c7_i32_50 = arith.constant 7 : i32
    %147 = arith.addi %0, %c7_i32_50 : i32
    %148 = arith.index_cast %147 : i32 to index
    %149 = memref.load %arg3[%148] : memref<8xf32, #tpu.memory_space<smem>>
    %150 = arith.index_cast %143 : i32 to index
    %c0_51 = arith.constant 0 : index
    %c0_52 = arith.constant 0 : index
    %151 = vector.load %arg4[%150, %c0_51, %c0_52] : memref<50x1x128xf32, #tpu.memory_space<vmem>>, vector<1x1x128xf32>
    %152 = vector.shape_cast %151 : vector<1x1x128xf32> to vector<1x128xf32>
    %153 = arith.index_cast %146 : i32 to index
    %c0_53 = arith.constant 0 : index
    %c0_54 = arith.constant 0 : index
    %154 = vector.load %arg4[%153, %c0_53, %c0_54] : memref<50x1x128xf32, #tpu.memory_space<vmem>>, vector<1x1x128xf32>
    %155 = vector.shape_cast %154 : vector<1x1x128xf32> to vector<1x128xf32>
    %156 = arith.subf %155, %152 : vector<1x128xf32>
    %157 = vector.broadcast %149 : f32 to vector<1x128xf32>
    %158 = arith.mulf %157, %156 : vector<1x128xf32>
    %159 = arith.addf %152, %158 : vector<1x128xf32>
    %c7 = arith.constant 7 : index
    %c0_55 = arith.constant 0 : index
    %160 = vector.load %arg10[%c7, %c0_55] : memref<8x128xf32, #tpu.memory_space<vmem>>, vector<1x128xf32>
    tpu.vector_store %arg10[%c7, %c0_55], %159 {strides = array<i32>} : memref<8x128xf32, #tpu.memory_space<vmem>>, vector<1x128xf32>,
    %c0_56 = arith.constant 0 : index
    %c0_57 = arith.constant 0 : index
    %161 = vector.load %arg10[%c0_56, %c0_57] : memref<8x128xf32, #tpu.memory_space<vmem>>, vector<8x128xf32>
    %162 = arith.truncf %161 : vector<8x128xf32> to vector<8x128xbf16>
    %c0_58 = arith.constant 0 : index
    %c0_59 = arith.constant 0 : index
    %163 = vector.load %arg5[%c0_58, %c0_59] : memref<128x128xbf16, #tpu.memory_space<vmem>>, vector<128x128xbf16>
    %cst = arith.constant dense<0.000000e+00> : vector<8x128xf32>
    %164 = tpu.matmul %162, %163, %cst {dimension_numbers = #tpu.dot_dimension_numbers<[1], [0], [0], [1], [0, 0, 1, 1], [], []>} : vector<8x128xbf16>, vector<128x128xbf16>, vector<8x128xf32> -> vector<8x128xf32>
    %c0_60 = arith.constant 0 : index
    %c0_61 = arith.constant 0 : index
    %165 = vector.load %arg6[%c0_60, %c0_61] : memref<1x128xf32, #tpu.memory_space<vmem>>, vector<1x128xf32>
    %166 = vector.broadcast %165 : vector<1x128xf32> to vector<8x128xf32>
    %167 = arith.addf %164, %166 : vector<8x128xf32>
    %cst_62 = arith.constant 0.000000e+00 : f32
    %168 = vector.broadcast %cst_62 : f32 to vector<8x128xf32>
    %169 = arith.subf %168, %167 : vector<8x128xf32>
    %170 = math.exp %169 : vector<8x128xf32>
    %cst_63 = arith.constant 1.000000e+00 : f32
    %171 = vector.broadcast %cst_63 : f32 to vector<8x128xf32>
    %172 = arith.addf %171, %170 : vector<8x128xf32>
    %173 = tpu.reciprocal %172 {approx = true} : vector<8x128xf32> -> vector<8x128xf32>
    %174 = arith.mulf %167, %173 : vector<8x128xf32>
    %175 = arith.truncf %174 : vector<8x128xf32> to vector<8x128xbf16>
    %c0_64 = arith.constant 0 : index
    %c0_65 = arith.constant 0 : index
    %176 = vector.load %arg7[%c0_64, %c0_65] : memref<128x128xbf16, #tpu.memory_space<vmem>>, vector<128x128xbf16>
    %cst_66 = arith.constant dense<0.000000e+00> : vector<8x128xf32>
    %177 = tpu.matmul %175, %176, %cst_66 {dimension_numbers = #tpu.dot_dimension_numbers<[1], [0], [0], [1], [0, 0, 1, 1], [], []>} : vector<8x128xbf16>, vector<128x128xbf16>, vector<8x128xf32> -> vector<8x128xf32>
    %c0_67 = arith.constant 0 : index
    %c0_68 = arith.constant 0 : index
    %178 = vector.load %arg8[%c0_67, %c0_68] : memref<1x128xf32, #tpu.memory_space<vmem>>, vector<1x128xf32>
    %179 = vector.broadcast %178 : vector<1x128xf32> to vector<8x128xf32>
    %180 = arith.addf %177, %179 : vector<8x128xf32>
    %cst_69 = arith.constant 0.000000e+00 : f32
    %181 = vector.broadcast %cst_69 : f32 to vector<8x128xf32>
    %182 = arith.subf %181, %180 : vector<8x128xf32>
    %183 = math.exp %182 : vector<8x128xf32>
    %cst_70 = arith.constant 1.000000e+00 : f32
    %184 = vector.broadcast %cst_70 : f32 to vector<8x128xf32>
    %185 = arith.addf %184, %183 : vector<8x128xf32>
    %186 = tpu.reciprocal %185 {approx = true} : vector<8x128xf32> -> vector<8x128xf32>
    %187 = arith.mulf %180, %186 : vector<8x128xf32>
    %c0_71 = arith.constant 0 : index
    %c0_72 = arith.constant 0 : index
    %188 = vector.load %arg9[%c0_71, %c0_72] : memref<8x128xf32, #tpu.memory_space<vmem>>, vector<8x128xf32>
    tpu.vector_store %arg9[%c0_71, %c0_72], %187 {strides = array<i32>} : memref<8x128xf32, #tpu.memory_space<vmem>>, vector<8x128xf32>,
    return
  }
  func.func @transform_0(%arg0: i32, %arg1: memref<8xi32, #tpu.memory_space<smem>>, %arg2: memref<8xi32, #tpu.memory_space<smem>>) -> i32 {
    %c0_i32 = arith.constant 0 : i32
    %c0_i32_0 = arith.constant 0 : i32
    return %c0_i32 : i32
  }
  func.func @transform_1(%arg0: i32, %arg1: memref<8xi32, #tpu.memory_space<smem>>, %arg2: memref<8xi32, #tpu.memory_space<smem>>) -> (i32, i32, i32) {
    %c0_i32 = arith.constant 0 : i32
    %c0_i32_0 = arith.constant 0 : i32
    %c0_i32_1 = arith.constant 0 : i32
    %c0_i32_2 = arith.constant 0 : i32
    return %c0_i32, %c0_i32_0, %c0_i32_1 : i32, i32, i32
  }
  func.func @transform_2(%arg0: i32, %arg1: memref<8xi32, #tpu.memory_space<smem>>, %arg2: memref<8xi32, #tpu.memory_space<smem>>) -> (i32, i32) {
    %c0_i32 = arith.constant 0 : i32
    %c0_i32_0 = arith.constant 0 : i32
    %c0_i32_1 = arith.constant 0 : i32
    return %c0_i32, %c0_i32_0 : i32, i32
  }
  func.func @transform_3(%arg0: i32, %arg1: memref<8xi32, #tpu.memory_space<smem>>, %arg2: memref<8xi32, #tpu.memory_space<smem>>) -> (i32, i32) {
    %c0_i32 = arith.constant 0 : i32
    %c0_i32_0 = arith.constant 0 : i32
    %c0_i32_1 = arith.constant 0 : i32
    return %c0_i32, %c0_i32_0 : i32, i32
  }
  func.func @transform_4(%arg0: i32, %arg1: memref<8xi32, #tpu.memory_space<smem>>, %arg2: memref<8xi32, #tpu.memory_space<smem>>) -> (i32, i32) {
    %c0_i32 = arith.constant 0 : i32
    %c0_i32_0 = arith.constant 0 : i32
    %c0_i32_1 = arith.constant 0 : i32
    return %c0_i32, %c0_i32_0 : i32, i32
  }
  func.func @transform_5(%arg0: i32, %arg1: memref<8xi32, #tpu.memory_space<smem>>, %arg2: memref<8xi32, #tpu.memory_space<smem>>) -> (i32, i32) {
    %c0_i32 = arith.constant 0 : i32
    %c0_i32_0 = arith.constant 0 : i32
    %c0_i32_1 = arith.constant 0 : i32
    return %c0_i32, %c0_i32_0 : i32, i32
  }
  func.func @transform_6(%arg0: i32, %arg1: memref<8xi32, #tpu.memory_space<smem>>, %arg2: memref<8xi32, #tpu.memory_space<smem>>) -> (i32, i32) {
    %c0_i32 = arith.constant 0 : i32
    %c0_i32_0 = arith.constant 0 : i32
    return %arg0, %c0_i32 : i32, i32
  }
}

</mosaic_0001>

<llo_original>
// kernel: diffusion_embedding_forward.1
$region0: #{diffusion_embedding_forward.1}
  #allocation0 [shape = 'u32[]', space=smem, size = 0x4, offset = 0x4, fixed_abs, tag = 'smem constant byte address 0x4 - core index']
  #allocation1 [shape = 'u32[144,128]{1,0:T(1,128)}', space=vmem, size = 0x12000, scoped, tag = 'internal scratch']
  #allocation2 [shape = 'f32[8,128]{1,0:T(8,128)}', space=vmem, size = 0x1000, scoped, tag = 'scratch operand']
  #allocation3 [shape = 's32[1]{0}', space=sflag, size = 0x4, scoped, tag = 'scoped memory for diffusion_embedding_forward.1']
  #allocation4 [shape = 'u8[512]{0}', space=smem, size = 0x200, scoped, tag = 'prefetched SMEM operand 0']
  #allocation5 [shape = 'u8[512]{0}', space=smem, size = 0x200, scoped, tag = 'prefetched SMEM operand 1']
  %s0 = inlined_call_operand.vmem [shape: s32[8], index: 0, kind: input, shape index: {}]
  %s1 = inlined_call_operand.vmem [shape: s32[8], index: 1, kind: input, shape index: {}]
  %s2 = inlined_call_operand.vmem [shape: f32[8], index: 2, kind: input, shape index: {}]
  %s3 = inlined_call_operand.vmem [shape: f32[50,1,128], index: 3, kind: input, shape index: {}]
  %s4 = inlined_call_operand.vmem [shape: bf16[128,128], index: 4, kind: input, shape index: {}]
  %s5 = inlined_call_operand.vmem [shape: f32[1,128], index: 5, kind: input, shape index: {}]
  %s6 = inlined_call_operand.vmem [shape: bf16[128,128], index: 6, kind: input, shape index: {}]
  %s7 = inlined_call_operand.vmem [shape: f32[1,128], index: 7, kind: input, shape index: {}]
  %s8 = inlined_call_operand.hbm [shape: f32[8,128], index: 8, kind: output, shape index: {}]
  %s9 = sld [smem:[#allocation0]]
  $region38: #{diffusion_embedding_forward.1} parent=0
    _
  %s11 = ssub.s32 1, %s9
  %s12 = scalar_select 0, %s11, %s9
  %s13 = sshll.u32 %s0, 4
  %s14 = int_to_ptr.vmem [resolvable:$true] %s13
  %16 = dma.vmem_to_smem %s14, 16, [#allocation4], [#allocation3]
  %s17 = sshll.u32 %s1, 4
  %s18 = int_to_ptr.vmem [resolvable:$true] %s17
  %20 = dma.vmem_to_smem %s18, 16, [#allocation5], [#allocation3]
  %21 = dma.done [#allocation3], 32
  %22 = sfence
  $region1: #{diffusion_embedding_forward.1} parent=0
    #allocation6 [shape = 'u8[512]{0}', space=smem, size = 0x200, scoped, tag = 'input window, operand 2, single buffered']
    #allocation7 [shape = 's32[1]{0}', space=sflag, size = 0x4, scoped, tag = 'scoped memory for diffusion_embedding_forward.1']
    #allocation8 [shape = 's32[1]{0}', space=sflag, size = 0x4, scoped, tag = 'scoped memory for diffusion_embedding_forward.1']
    #allocation9 [shape = 'u8[4096]{0}', space=vmem, size = 0x1000, scoped, tag = 'output window, operand 0, single buffered']
    %23 = vsyncpa [#allocation8], 0
    %24 = vsyncpa [#allocation7], 0
    // Predicated region
    $region2: #{diffusion_embedding_forward.1} parent=1 // pred_check
      _
    $region3: #{diffusion_embedding_forward.1} parent=1 // pred_check_branch
      %26 = sbr.rel (0) target = $region5
    $region4: #{diffusion_embedding_forward.1} parent=1 // pred_region
      %s28 = ssub.s32 16, 16
      %29 = vsyncadd [#allocation8], %s28
      %s31 = sshll.u32 %s2, 4
      %s32 = int_to_ptr.vmem [resolvable:$true] %s31
      %34 = dma.vmem_to_smem %s32, 16, [#allocation6], [#allocation8]
    $region5: #{diffusion_embedding_forward.1} parent=1 // pred_fallthru
      _
    // Predicated region
    $region6: #{diffusion_embedding_forward.1} parent=1 // pred_check
      _
    $region7: #{diffusion_embedding_forward.1} parent=1 // pred_check_branch
      %36 = sbr.rel (0) target = $region9
    $region8: #{diffusion_embedding_forward.1} parent=1 // pred_region
      _
    $region9: #{diffusion_embedding_forward.1} parent=1 // pred_fallthru
      _
    // Predicated region
    $region10: #{diffusion_embedding_forward.1} parent=1 // pred_check
      _
    $region11: #{diffusion_embedding_forward.1} parent=1 // pred_check_branch
      %38 = sbr.rel (0) target = $region13
    $region12: #{diffusion_embedding_forward.1} parent=1 // pred_region
      _
    $region13: #{diffusion_embedding_forward.1} parent=1 // pred_fallthru
      _
    // Predicated region
    $region14: #{diffusion_embedding_forward.1} parent=1 // pred_check
      _
    $region15: #{diffusion_embedding_forward.1} parent=1 // pred_check_branch
      %40 = sbr.rel (0) target = $region17
    $region16: #{diffusion_embedding_forward.1} parent=1 // pred_region
      _
    $region17: #{diffusion_embedding_forward.1} parent=1 // pred_fallthru
      _
    // Predicated region
    $region18: #{diffusion_embedding_forward.1} parent=1 // pred_check
      _
    $region19: #{diffusion_embedding_forward.1} parent=1 // pred_check_branch
      %42 = sbr.rel (0) target = $region21
    $region20: #{diffusion_embedding_forward.1} parent=1 // pred_region
      _
    $region21: #{diffusion_embedding_forward.1} parent=1 // pred_fallthru
      _
    // Predicated region
    $region22: #{diffusion_embedding_forward.1} parent=1 // pred_check
      _
    $region23: #{diffusion_embedding_forward.1} parent=1 // pred_check_branch
      %44 = sbr.rel (0) target = $region25
    $region24: #{diffusion_embedding_forward.1} parent=1 // pred_region
      _
    $region25: #{diffusion_embedding_forward.1} parent=1 // pred_fallthru
      _
    // Predicated region
    $region26: #{diffusion_embedding_forward.1} parent=1 // pred_check
      _
    $region27: #{diffusion_embedding_forward.1} parent=1 // pred_check_branch
      %46 = sbr.rel (0) target = $region29
    $region28: #{diffusion_embedding_forward.1} parent=1 // pred_region
      %47 = dma.done [#allocation8], 16
    $region29: #{diffusion_embedding_forward.1} parent=1 // pred_fallthru
      _
    %48 = sfence
    %s50 = smul.u32 0, 8
    %s51 = sld [smem:[#allocation4 + %s50]]
    %s52 = sld [smem:[#allocation5 + %s50]]
    %s53 = sld [smem:[#allocation6 + %s50]]
    %s54 = scalar_lea.vmem %s3, %s51
    %v55 = vld [vmem:[%s54] sm:$0x1]
    %s56 = scalar_lea.vmem %s3, %s52
    %v57 = vld [vmem:[%s56] sm:$0x1]
    %v58 = vsub.f32 %v57, %v55
    %v59 = vstv %s53
    %v60 = vmul.f32 %v59, %v58
    %v61 = vadd.f32 %v55, %v60
    %62 = vst [vmem:[#allocation2] sm:$0x1] %v61
    %s63 = sadd.s32 %s50, 1
    %s64 = sld [smem:[#allocation4 + %s63]]
    %s65 = sld [smem:[#allocation5 + %s63]]
    %s66 = sld [smem:[#allocation6 + %s63]]
    %s67 = scalar_lea.vmem %s3, %s64
    %v68 = vld [vmem:[%s67] sm:$0x1]
    %s69 = scalar_lea.vmem %s3, %s65
    %v70 = vld [vmem:[%s69] sm:$0x1]
    %v71 = vsub.f32 %v70, %v68
    %v72 = vstv %s66
    %v73 = vmul.f32 %v72, %v71
    %v74 = vadd.f32 %v68, %v73
    %75 = vst [vmem:[#allocation2 + $0x1] sm:$0x1] %v74
    %s76 = sadd.s32 %s50, 2
    %s77 = sld [smem:[#allocation4 + %s76]]
    %s78 = sld [smem:[#allocation5 + %s76]]
    %s79 = sld [smem:[#allocation6 + %s76]]
    %s80 = scalar_lea.vmem %s3, %s77
    %v81 = vld [vmem:[%s80] sm:$0x1]
    %s82 = scalar_lea.vmem %s3, %s78
    %v83 = vld [vmem:[%s82] sm:$0x1]
    %v84 = vsub.f32 %v83, %v81
    %v85 = vstv %s79
    %v86 = vmul.f32 %v85, %v84
    %v87 = vadd.f32 %v81, %v86
    %88 = vst [vmem:[#allocation2 + $0x2] sm:$0x1] %v87
    %s89 = sadd.s32 %s50, 3
    %s90 = sld [smem:[#allocation4 + %s89]]
    %s91 = sld [smem:[#allocation5 + %s89]]
    %s92 = sld [smem:[#allocation6 + %s89]]
    %s93 = scalar_lea.vmem %s3, %s90
    %v94 = vld [vmem:[%s93] sm:$0x1]
    %s95 = scalar_lea.vmem %s3, %s91
    %v96 = vld [vmem:[%s95] sm:$0x1]
    %v97 = vsub.f32 %v96, %v94
    %v98 = vstv %s92
    %v99 = vmul.f32 %v98, %v97
    %v100 = vadd.f32 %v94, %v99
    %101 = vst [vmem:[#allocation2 + $0x3] sm:$0x1] %v100
    %s102 = sadd.s32 %s50, 4
    %s103 = sld [smem:[#allocation4 + %s102]]
    %s104 = sld [smem:[#allocation5 + %s102]]
    %s105 = sld [smem:[#allocation6 + %s102]]
    %s106 = scalar_lea.vmem %s3, %s103
    %v107 = vld [vmem:[%s106] sm:$0x1]
    %s108 = scalar_lea.vmem %s3, %s104
    %v109 = vld [vmem:[%s108] sm:$0x1]
    %v110 = vsub.f32 %v109, %v107
    %v111 = vstv %s105
    %v112 = vmul.f32 %v111, %v110
    %v113 = vadd.f32 %v107, %v112
    %114 = vst [vmem:[#allocation2 + $0x4] sm:$0x1] %v113
    %s115 = sadd.s32 %s50, 5
    %s116 = sld [smem:[#allocation4 + %s115]]
    %s117 = sld [smem:[#allocation5 + %s115]]
    %s118 = sld [smem:[#allocation6 + %s115]]
    %s119 = scalar_lea.vmem %s3, %s116
    %v120 = vld [vmem:[%s119] sm:$0x1]
    %s121 = scalar_lea.vmem %s3, %s117
    %v122 = vld [vmem:[%s121] sm:$0x1]
    %v123 = vsub.f32 %v122, %v120
    %v124 = vstv %s118
    %v125 = vmul.f32 %v124, %v123
    %v126 = vadd.f32 %v120, %v125
    %127 = vst [vmem:[#allocation2 + $0x5] sm:$0x1] %v126
    %s128 = sadd.s32 %s50, 6
    %s129 = sld [smem:[#allocation4 + %s128]]
    %s130 = sld [smem:[#allocation5 + %s128]]
    %s131 = sld [smem:[#allocation6 + %s128]]
    %s132 = scalar_lea.vmem %s3, %s129
    %v133 = vld [vmem:[%s132] sm:$0x1]
    %s134 = scalar_lea.vmem %s3, %s130
    %v135 = vld [vmem:[%s134] sm:$0x1]
    %v136 = vsub.f32 %v135, %v133
    %v137 = vstv %s131
    %v138 = vmul.f32 %v137, %v136
    %v139 = vadd.f32 %v133, %v138
    %140 = vst [vmem:[#allocation2 + $0x6] sm:$0x1] %v139
    %s141 = sadd.s32 %s50, 7
    %s142 = sld [smem:[#allocation4 + %s141]]
    %s143 = sld [smem:[#allocation5 + %s141]]
    %s144 = sld [smem:[#allocation6 + %s141]]
    %s145 = scalar_lea.vmem %s3, %s142
    %v146 = vld [vmem:[%s145] sm:$0x1]
    %s147 = scalar_lea.vmem %s3, %s143
    %v148 = vld [vmem:[%s147] sm:$0x1]
    %v149 = vsub.f32 %v148, %v146
    %v150 = vstv %s144
    %v151 = vmul.f32 %v150, %v149
    %v152 = vadd.f32 %v146, %v151
    %153 = vst [vmem:[#allocation2 + $0x7] sm:$0x1] %v152
    %v154 = vld [vmem:[#allocation2] sm:$0xff]
    %v155 = vpack.c.bf16 %v154, %v154
    %v156 = vld [vmem:[%s4] sm:$0xf]
    %v157 = vld [vmem:[%s4 + $0x4] sm:$0xf]
    %v158 = vld [vmem:[%s4 + $0x8] sm:$0xf]
    %v159 = vld [vmem:[%s4 + $0xc] sm:$0xf]
    %v160 = vld [vmem:[%s4 + $0x10] sm:$0xf]
    %v161 = vld [vmem:[%s4 + $0x14] sm:$0xf]
    %v162 = vld [vmem:[%s4 + $0x18] sm:$0xf]
    %v163 = vld [vmem:[%s4 + $0x1c] sm:$0xf]
    %v164 = vld [vmem:[%s4 + $0x20] sm:$0xf]
    %v165 = vld [vmem:[%s4 + $0x24] sm:$0xf]
    %v166 = vld [vmem:[%s4 + $0x28] sm:$0xf]
    %v167 = vld [vmem:[%s4 + $0x2c] sm:$0xf]
    %v168 = vld [vmem:[%s4 + $0x30] sm:$0xf]
    %v169 = vld [vmem:[%s4 + $0x34] sm:$0xf]
    %v170 = vld [vmem:[%s4 + $0x38] sm:$0xf]
    %v171 = vld [vmem:[%s4 + $0x3c] sm:$0xf]
    %v172 = vld [vmem:[%s5] sm:$0x1]
    %v174 = vlaneseq
    %v175 = vshrl.u32 %v174, 7
    %v176 = vsub.s32 0, %v175
    %v177 = vrot.slane %v172, %v176
    %v195 = vunpack.c.l.b16 %v156
    %v196 = vunpack.c.l.b16 %v157
    %v197 = vunpack.c.l.b16 %v158
    %v198 = vunpack.c.l.b16 %v159
    %v199 = vunpack.c.l.b16 %v160
    %v200 = vunpack.c.l.b16 %v161
    %v201 = vunpack.c.l.b16 %v162
    %v202 = vunpack.c.l.b16 %v163
    %v203 = vunpack.c.l.b16 %v164
    %v204 = vunpack.c.l.b16 %v165
    %v205 = vunpack.c.l.b16 %v166
    %v206 = vunpack.c.l.b16 %v167
    %v207 = vunpack.c.l.b16 %v168
    %v208 = vunpack.c.l.b16 %v169
    %v209 = vunpack.c.l.b16 %v170
    %v210 = vunpack.c.l.b16 %v171
    %v211 = vpack.c.b16 %v196, %v195
    %v212 = vpack.c.b16 %v198, %v197
    %v213 = vpack.c.b16 %v200, %v199
    %v214 = vpack.c.b16 %v202, %v201
    %v215 = vpack.c.b16 %v204, %v203
    %v216 = vpack.c.b16 %v206, %v205
    %v217 = vpack.c.b16 %v208, %v207
    %v218 = vpack.c.b16 %v210, %v209
    %227 = vmatprep.subr.bf16.mxu0 0
    %228 = vmatpush1.bf16.msra.mxu0 %v211
    %229 = vmatprep.subr.bf16.mxu0 0
    %230 = vmatpush1.bf16.msra.mxu0 %v212
    %231 = vmatprep.subr.bf16.mxu0 0
    %232 = vmatpush1.bf16.msra.mxu0 %v213
    %233 = vmatprep.subr.bf16.mxu0 0
    %234 = vmatpush1.bf16.msra.mxu0 %v214
    %235 = vmatprep.subr.bf16.mxu0 0
    %236 = vmatpush1.bf16.msra.mxu0 %v215
    %237 = vmatprep.subr.bf16.mxu0 0
    %238 = vmatpush1.bf16.msra.mxu0 %v216
    %239 = vmatprep.subr.bf16.mxu0 0
    %240 = vmatpush1.bf16.msra.mxu0 %v217
    %241 = vmatprep.subr.bf16.mxu0 0
    %242 = vmatpush1.bf16.msra.mxu0 %v218
    %243 = vmatprep.subr.bf16.mxu0 0
    %244 = vmatpush1.bf16.msra.mxu0 0
    %245 = vmatprep.subr.bf16.mxu0 0
    %246 = vmatpush1.bf16.msra.mxu0 0
    %247 = vmatprep.subr.bf16.mxu0 0
    %248 = vmatpush1.bf16.msra.mxu0 0
    %249 = vmatprep.subr.bf16.mxu0 0
    %250 = vmatpush1.bf16.msra.mxu0 0
    %251 = vmatprep.subr.bf16.mxu0 0
    %252 = vmatpush1.bf16.msra.mxu0 0
    %253 = vmatprep.subr.bf16.mxu0 0
    %254 = vmatpush1.bf16.msra.mxu0 0
    %255 = vmatprep.subr.bf16.mxu0 0
    %256 = vmatpush1.bf16.msra.mxu0 0
    %257 = vmatprep.subr.bf16.mxu0 0
    %258 = vmatpush1.bf16.msra.mxu0 0
    %259 = vmatprep.mubr.bf16.mxu0 0
    %260 = vmatmul.mubr.bf16.gmra.mrb[0].mxu0 %v155
    %v261 = vpop.f32.mrb[0].mxu0
    %v262 = vadd.f32 %v177, %v261
    %v263 = vpop.f32.mrb[0].mxu0
    %v264 = vpop.f32.mrb[0].mxu0
    %v265 = vpop.f32.mrb[0].mxu0
    %266 = vdwg.mxu0
    %v267 = vsub.f32 0.0, %v262
    %v268 = vmul.f32 %v267, 1.442695
    %v269 = vpow.pop %v268
    %v270 = vadd.f32 %v269, 1.0
    %v271 = vrcp.pop %v270
    %v272 = vmul.f32 %v262, %v271
    %v273 = vpack.c.bf16 %v272, %v272
    %v274 = vld [vmem:[%s6] sm:$0xf]
    %v275 = vld [vmem:[%s6 + $0x4] sm:$0xf]
    %v276 = vld [vmem:[%s6 + $0x8] sm:$0xf]
    %v277 = vld [vmem:[%s6 + $0xc] sm:$0xf]
    %v278 = vld [vmem:[%s6 + $0x10] sm:$0xf]
    %v279 = vld [vmem:[%s6 + $0x14] sm:$0xf]
    %v280 = vld [vmem:[%s6 + $0x18] sm:$0xf]
    %v281 = vld [vmem:[%s6 + $0x1c] sm:$0xf]
    %v282 = vld [vmem:[%s6 + $0x20] sm:$0xf]
    %v283 = vld [vmem:[%s6 + $0x24] sm:$0xf]
    %v284 = vld [vmem:[%s6 + $0x28] sm:$0xf]
    %v285 = vld [vmem:[%s6 + $0x2c] sm:$0xf]
    %v286 = vld [vmem:[%s6 + $0x30] sm:$0xf]
    %v287 = vld [vmem:[%s6 + $0x34] sm:$0xf]
    %v288 = vld [vmem:[%s6 + $0x38] sm:$0xf]
    %v289 = vld [vmem:[%s6 + $0x3c] sm:$0xf]
    %v290 = vld [vmem:[%s7] sm:$0x1]
    %v292 = vlaneseq
    %v293 = vshrl.u32 %v292, 7
    %v294 = vsub.s32 0, %v293
    %v295 = vrot.slane %v290, %v294
    %v313 = vunpack.c.l.b16 %v274
    %v314 = vunpack.c.l.b16 %v275
    %v315 = vunpack.c.l.b16 %v276
    %v316 = vunpack.c.l.b16 %v277
    %v317 = vunpack.c.l.b16 %v278
    %v318 = vunpack.c.l.b16 %v279
    %v319 = vunpack.c.l.b16 %v280
    %v320 = vunpack.c.l.b16 %v281
    %v321 = vunpack.c.l.b16 %v282
    %v322 = vunpack.c.l.b16 %v283
    %v323 = vunpack.c.l.b16 %v284
    %v324 = vunpack.c.l.b16 %v285
    %v325 = vunpack.c.l.b16 %v286
    %v326 = vunpack.c.l.b16 %v287
    %v327 = vunpack.c.l.b16 %v288
    %v328 = vunpack.c.l.b16 %v289
    %v329 = vpack.c.b16 %v314, %v313
    %v330 = vpack.c.b16 %v316, %v315
    %v331 = vpack.c.b16 %v318, %v317
    %v332 = vpack.c.b16 %v320, %v319
    %v333 = vpack.c.b16 %v322, %v321
    %v334 = vpack.c.b16 %v324, %v323
    %v335 = vpack.c.b16 %v326, %v325
    %v336 = vpack.c.b16 %v328, %v327
    %345 = vmatprep.subr.bf16.mxu0 0
    %346 = vmatpush1.bf16.msra.mxu0 %v329
    %347 = vmatprep.subr.bf16.mxu0 0
    %348 = vmatpush1.bf16.msra.mxu0 %v330
    %349 = vmatprep.subr.bf16.mxu0 0
    %350 = vmatpush1.bf16.msra.mxu0 %v331
    %351 = vmatprep.subr.bf16.mxu0 0
    %352 = vmatpush1.bf16.msra.mxu0 %v332
    %353 = vmatprep.subr.bf16.mxu0 0
    %354 = vmatpush1.bf16.msra.mxu0 %v333
    %355 = vmatprep.subr.bf16.mxu0 0
    %356 = vmatpush1.bf16.msra.mxu0 %v334
    %357 = vmatprep.subr.bf16.mxu0 0
    %358 = vmatpush1.bf16.msra.mxu0 %v335
    %359 = vmatprep.subr.bf16.mxu0 0
    %360 = vmatpush1.bf16.msra.mxu0 %v336
    %361 = vmatprep.subr.bf16.mxu0 0
    %362 = vmatpush1.bf16.msra.mxu0 0
    %363 = vmatprep.subr.bf16.mxu0 0
    %364 = vmatpush1.bf16.msra.mxu0 0
    %365 = vmatprep.subr.bf16.mxu0 0
    %366 = vmatpush1.bf16.msra.mxu0 0
    %367 = vmatprep.subr.bf16.mxu0 0
    %368 = vmatpush1.bf16.msra.mxu0 0
    %369 = vmatprep.subr.bf16.mxu0 0
    %370 = vmatpush1.bf16.msra.mxu0 0
    %371 = vmatprep.subr.bf16.mxu0 0
    %372 = vmatpush1.bf16.msra.mxu0 0
    %373 = vmatprep.subr.bf16.mxu0 0
    %374 = vmatpush1.bf16.msra.mxu0 0
    %375 = vmatprep.subr.bf16.mxu0 0
    %376 = vmatpush1.bf16.msra.mxu0 0
    %377 = vmatprep.mubr.bf16.mxu0 0
    %378 = vmatmul.mubr.bf16.gmra.mrb[0].mxu0 %v273
    %v379 = vpop.f32.mrb[0].mxu0
    %v380 = vadd.f32 %v295, %v379
    %v381 = vpop.f32.mrb[0].mxu0
    %v382 = vpop.f32.mrb[0].mxu0
    %v383 = vpop.f32.mrb[0].mxu0
    %384 = vdwg.mxu0
    %v385 = vsub.f32 0.0, %v380
    %v386 = vmul.f32 %v385, 1.442695
    %v387 = vpow.pop %v386
    %v388 = vadd.f32 %v387, 1.0
    %v389 = vrcp.pop %v388
    %v390 = vmul.f32 %v380, %v389
    %391 = vst [vmem:[#allocation9] sm:$0xff] %v390
    // Predicated region
    $region30: #{diffusion_embedding_forward.1} parent=1 // pred_check
      _
    $region31: #{diffusion_embedding_forward.1} parent=1 // pred_check_branch
      %393 = sbr.rel (0) target = $region33
    $region32: #{diffusion_embedding_forward.1} parent=1 // pred_region
      %s395 = ssub.s32 128, 128
      %396 = vsyncadd [#allocation7], %s395
      %s398 = sshll.u32 [#allocation9], 4
      %s399 = int_to_ptr.vmem [resolvable:$true] %s398
      %401 = dma.vmem_to_hbm [thread:$0]  %s399, 128, %s8, [#allocation7]
    $region33: #{diffusion_embedding_forward.1} parent=1 // pred_fallthru
      _
    // Predicated region
    $region34: #{diffusion_embedding_forward.1} parent=1 // pred_check
      _
    $region35: #{diffusion_embedding_forward.1} parent=1 // pred_check_branch
      %403 = sbr.rel (0) target = $region37
    $region36: #{diffusion_embedding_forward.1} parent=1 // pred_region
      %404 = dma.done [#allocation7], 128
    $region37: #{diffusion_embedding_forward.1} parent=1 // pred_fallthru
      _
    %405 = vsyncpa [#allocation7], 1
    %406 = vsyncpa [#allocation8], 1

</llo_original>
